<compile_context>
chip_gen: v6e
topology: v6e:2x2x1
jax: 0.10.0
libtpu: 0.0.40
codegen_flags: <defaults>
</compile_context>

<pallas_src>
import jax
import jax.numpy as jnp
from jax.experimental import pallas as pl
from jax.experimental.pallas import tpu as pltpu

HIDDEN = 1024        # fixed by the module definition (fc1 out / fc2 in)
LANE = 128           # TPU lane width
SUBLANE = 8
MAX_TB = 256         # batch tile cap: fills the 256-wide MXU on v6e/v7x
K_TILE = 512         # fc1 contraction tile when input_size is large


def _round_up(a, m):
    return -(-a // m) * m


# ---------------------------------------------------------------------------
# Fused kernel:  y = relu(x @ w1 + b1) @ w2 + b2
# Grid = (batch tiles ["parallel"], fc1 contraction tiles ["arbitrary"]).
# ---------------------------------------------------------------------------
def _view_classifier_kernel(x_ref, w1_ref, b1_ref, w2_ref, b2_ref, o_ref, h_acc):
    # x_ref : (TB, TK)  f32 batch/contraction tile (GRL forward == identity)
    # w1_ref: (TK, H)   bf16 fc1 weight K-slab, (in, out) layout
    # b1_ref: (1, H)    f32
    # w2_ref: (H, Cp)   bf16 fc2 weight, classes padded lane-dense
    # b2_ref: (1, Cp)   f32
    # o_ref : (TB, Cp)
    # h_acc : (TB, H)   f32 VMEM accumulator for the fc1 contraction
    k = pl.program_id(1)

    @pl.when(k == 0)
    def _():
        h_acc[...] = jnp.zeros_like(h_acc)

    h_acc[...] += jnp.dot(
        x_ref[...].astype(jnp.bfloat16),
        w1_ref[...],
        preferred_element_type=jnp.float32,
    )

    @pl.when(k == pl.num_programs(1) - 1)
    def _():
        h = jnp.maximum(h_acc[...] + b1_ref[...], 0.0)
        y = jnp.dot(h.astype(jnp.bfloat16), w2_ref[...],
                    preferred_element_type=jnp.float32) + b2_ref[...]
        o_ref[...] = y.astype(o_ref.dtype)


def _pick_batch_tiling(batch):
    """Return (TB, padded_batch) with minimal padding waste and TB <= MAX_TB."""
    bp = _round_up(batch, SUBLANE)
    if bp <= MAX_TB:
        return bp, bp
    n_tiles = -(-bp // MAX_TB)                       # ceil
    tb = _round_up(-(-bp // n_tiles), SUBLANE)
    # TODO(synk): on v7x, when compute-bound with a single tile, split into 2
    #             tiles so both TensorCores get work (neutral when mem-bound).
    return tb, n_tiles * tb


# ---------------------------------------------------------------------------
# One-time parameter prep (do NOT call per forward step):
#   * weights cast to bf16 (MXU operands), kept in (in, out) layout
#   * fc2 padded to a lane-dense class dim (multiple of 128)
#   * fc1 padded along input_size to a multiple of the contraction tile
#   * biases reshaped to (1, ·) f32 rows
# ---------------------------------------------------------------------------
def prepare_params(params):
    w1, b1, w2, b2 = params["w1"], params["b1"], params["w2"], params["b2"]
    D, H = w1.shape
    C = w2.shape[1]
    Cp = _round_up(max(C, LANE), LANE)
    Dp = D if D <= K_TILE else _round_up(D, K_TILE)
    if Dp != D:
        w1 = jnp.pad(w1, ((0, Dp - D), (0, 0)))
    if Cp != C:
        w2 = jnp.pad(w2, ((0, 0), (0, Cp - C)))
        b2 = jnp.pad(b2, (0, Cp - C))
    return {
        "w1": w1.astype(jnp.bfloat16),                    # (Dp, H)
        "b1": b1.reshape(1, H).astype(jnp.float32),       # (1, H)
        "w2": w2.astype(jnp.bfloat16),                    # (H, Cp)
        "b2": b2.reshape(1, Cp).astype(jnp.float32),      # (1, Cp)
    }


# ---------------------------------------------------------------------------
# Forward wrapper
# ---------------------------------------------------------------------------
def view_classifier_forward(prepped, x, *, num_classes):
    """x: (B, input_size) f32 -> (B, num_classes). Matches ViewClassifier.forward."""
    w1, b1, w2, b2 = prepped["w1"], prepped["b1"], prepped["w2"], prepped["b2"]
    Dp, H = w1.shape
    Cp = w2.shape[1]
    B, D = x.shape

    TK = Dp if Dp <= K_TILE else K_TILE
    TB, Bp = _pick_batch_tiling(B)

    if Bp != B or Dp != D:
        x = jnp.pad(x, ((0, Bp - B), (0, Dp - D)))

    grid = (Bp // TB, Dp // TK)
    out_dtype = x.dtype

    flops = 2 * Bp * (Dp * H + H * Cp)
    bytes_accessed = (
        Bp * Dp * x.dtype.itemsize          # x
        + Dp * H * 2 + H * Cp * 2           # bf16 weights
        + H * 4 + Cp * 4                    # biases
        + Bp * Cp * x.dtype.itemsize        # output
    )

    out = pl.pallas_call(
        _view_classifier_kernel,
        out_shape=jax.ShapeDtypeStruct((Bp, Cp), out_dtype),
        grid=grid,
        in_specs=[
            pl.BlockSpec((TB, TK), lambda i, k: (i, k)),   # x tile
            pl.BlockSpec((TK, H), lambda i, k: (k, 0)),    # w1 K-slab (pipelined)
            pl.BlockSpec((1, H), lambda i, k: (0, 0)),     # b1 (resident)
            pl.BlockSpec((H, Cp), lambda i, k: (0, 0)),    # w2 (resident)
            pl.BlockSpec((1, Cp), lambda i, k: (0, 0)),    # b2 (resident)
        ],
        out_specs=pl.BlockSpec((TB, Cp), lambda i, k: (i, 0)),
        scratch_shapes=[pltpu.VMEM((TB, H), jnp.float32)],
        compiler_params=pltpu.CompilerParams(
            dimension_semantics=("parallel", "arbitrary"),
            vmem_limit_bytes=32 * 1024 * 1024,
        ),
        cost_estimate=pl.CostEstimate(
            flops=flops, transcendentals=0, bytes_accessed=bytes_accessed),
    )(x, w1, b1, w2, b2)

    return out[:B, :num_classes]


# ---------------------------------------------------------------------------
# Parameter init matching the PyTorch module:
#   nn.Linear weight (out, in): kaiming_normal_(mode='fan_out', relu)
#     -> std = sqrt(2 / out_features); bias filled with 0.01.
#   Stored here in (in, out) layout, f32 "master" copies.
# ---------------------------------------------------------------------------
def init_params(key, input_size, num_classes, hidden=HIDDEN):
    k1, k2 = jax.random.split(key)
    std1 = (2.0 / hidden) ** 0.5
    std2 = (2.0 / num_classes) ** 0.5
    return {
        "w1": std1 * jax.random.normal(k1, (input_size, hidden), jnp.float32),
        "b1": jnp.full((hidden,), 0.01, jnp.float32),
        "w2": std2 * jax.random.normal(k2, (hidden, num_classes), jnp.float32),
        "b2": jnp.full((num_classes,), 0.01, jnp.float32),
    }


if __name__ == "__main__":
    key = jax.random.PRNGKey(0)
    kx, kp = jax.random.split(key)

    B, D, C = 16, 64, 8        # batch, input_size, num_classes
    x = jax.random.normal(kx, (B, D), jnp.float32)
    params = init_params(kp, input_size=D, num_classes=C)
    prepped = prepare_params(params)   # one-time layout/pad/cast, reused per call

    fwd = jax.jit(view_classifier_forward, static_argnames=("num_classes",))
    out = jax.block_until_ready(fwd(prepped, x, num_classes=C))

    assert out.shape == (B, C), out.shape
    assert out.dtype == jnp.float32

    # Reference 1 (tight): same math as the kernel — bf16 operands, f32 accum.
    w1b = params["w1"].astype(jnp.bfloat16)
    w2b = params["w2"].astype(jnp.bfloat16)
    h_bf = jnp.maximum(
        jnp.dot(x.astype(jnp.bfloat16), w1b, preferred_element_type=jnp.float32)
        + params["b1"], 0.0)
    y_bf = jnp.dot(h_bf.astype(jnp.bfloat16), w2b,
                   preferred_element_type=jnp.float32) + params["b2"]
    assert jnp.allclose(out, y_bf, atol=1e-2, rtol=1e-2), \
        float(jnp.max(jnp.abs(out - y_bf)))

    # Reference 2 (sanity): full-f32 PyTorch-equivalent forward; looser
    # tolerance because the kernel intentionally uses bf16 MXU operands.
    h32 = jnp.maximum(x @ params["w1"] + params["b1"], 0.0)
    y32 = h32 @ params["w2"] + params["b2"]
    assert jnp.allclose(out, y32, atol=1e-1, rtol=5e-2), \
        float(jnp.max(jnp.abs(out - y32)))

    print("KERNEL_OK")
</pallas_src>

<mosaic_0001>
module attributes {stable_mosaic.version = 11 : i64} {
  func.func @_view_classifier_kernel(%arg0: i32, %arg1: i32, %arg2: memref<16x64xf32, #tpu.memory_space<vmem>>, %arg3: memref<64x1024xbf16, #tpu.memory_space<vmem>>, %arg4: memref<1x1024xf32, #tpu.memory_space<vmem>>, %arg5: memref<1024x128xbf16, #tpu.memory_space<vmem>>, %arg6: memref<1x128xf32, #tpu.memory_space<vmem>>, %arg7: memref<16x128xf32, #tpu.memory_space<vmem>>, %arg8: memref<16x1024xf32, #tpu.memory_space<vmem>>) attributes {dimension_semantics = [#tpu.dimension_semantics<parallel>, #tpu.dimension_semantics<arbitrary>], iteration_bounds = array<i64: 1, 1>, scalar_prefetch = 0 : i64, scratch_operands = 1 : i64, tpu.core_type = #tpu.core_type<tc>, window_params = [{transform_indices = @transform_0, window_bounds = array<i64: 16, 64>}, {transform_indices = @transform_1, window_bounds = array<i64: 64, 1024>}, {pipeline_mode = #tpu.pipeline_mode<synchronous>, transform_indices = @transform_2, window_bounds = array<i64: 1, 1024>}, {pipeline_mode = #tpu.pipeline_mode<synchronous>, transform_indices = @transform_3, window_bounds = array<i64: 1024, 128>}, {pipeline_mode = #tpu.pipeline_mode<synchronous>, transform_indices = @transform_4, window_bounds = array<i64: 1, 128>}, {transform_indices = @transform_5, window_bounds = array<i64: 16, 128>}]} {
    %c0_i32 = arith.constant 0 : i32
    %0 = arith.cmpi eq, %arg1, %c0_i32 : i32
    %1 = arith.extui %0 : i1 to i32
    %c0_i32_0 = arith.constant 0 : i32
    %2 = arith.cmpi ne, %1, %c0_i32_0 : i32
    scf.if %2 {
      %cst_10 = arith.constant 0.000000e+00 : f32
      %13 = vector.broadcast %cst_10 : f32 to vector<16x1024xf32>
      %c0_11 = arith.constant 0 : index
      %c0_12 = arith.constant 0 : index
      %14 = vector.load %arg8[%c0_11, %c0_12] : memref<16x1024xf32, #tpu.memory_space<vmem>>, vector<16x1024xf32>
      tpu.vector_store %arg8[%c0_11, %c0_12], %13 {strides = array<i32>} : memref<16x1024xf32, #tpu.memory_space<vmem>>, vector<16x1024xf32>,
    } else {
    }
    %c0 = arith.constant 0 : index
    %c0_1 = arith.constant 0 : index
    %3 = vector.load %arg8[%c0, %c0_1] : memref<16x1024xf32, #tpu.memory_space<vmem>>, vector<16x1024xf32>
    %c0_2 = arith.constant 0 : index
    %c0_3 = arith.constant 0 : index
    %4 = vector.load %arg2[%c0_2, %c0_3] : memref<16x64xf32, #tpu.memory_space<vmem>>, vector<16x64xf32>
    %5 = arith.truncf %4 : vector<16x64xf32> to vector<16x64xbf16>
    %c0_4 = arith.constant 0 : index
    %c0_5 = arith.constant 0 : index
    %6 = vector.load %arg3[%c0_4, %c0_5] : memref<64x1024xbf16, #tpu.memory_space<vmem>>, vector<64x1024xbf16>
    %cst = arith.constant dense<0.000000e+00> : vector<16x1024xf32>
    %7 = tpu.matmul %5, %6, %cst {dimension_numbers = #tpu.dot_dimension_numbers<[1], [0], [0], [1], [0, 0, 1, 1], [], []>} : vector<16x64xbf16>, vector<64x1024xbf16>, vector<16x1024xf32> -> vector<16x1024xf32>
    %8 = arith.addf %3, %7 : vector<16x1024xf32>
    %c0_6 = arith.constant 0 : index
    %c0_7 = arith.constant 0 : index
    %9 = vector.load %arg8[%c0_6, %c0_7] : memref<16x1024xf32, #tpu.memory_space<vmem>>, vector<16x1024xf32>
    tpu.vector_store %arg8[%c0_6, %c0_7], %8 {strides = array<i32>} : memref<16x1024xf32, #tpu.memory_space<vmem>>, vector<16x1024xf32>,
    %c0_i32_8 = arith.constant 0 : i32
    %10 = arith.cmpi eq, %arg1, %c0_i32_8 : i32
    %11 = arith.extui %10 : i1 to i32
    %c0_i32_9 = arith.constant 0 : i32
    %12 = arith.cmpi ne, %11, %c0_i32_9 : i32
    scf.if %12 {
      %c0_10 = arith.constant 0 : index
      %c0_11 = arith.constant 0 : index
      %13 = vector.load %arg8[%c0_10, %c0_11] : memref<16x1024xf32, #tpu.memory_space<vmem>>, vector<16x1024xf32>
      %c0_12 = arith.constant 0 : index
      %c0_13 = arith.constant 0 : index
      %14 = vector.load %arg4[%c0_12, %c0_13] : memref<1x1024xf32, #tpu.memory_space<vmem>>, vector<1x1024xf32>
      %15 = vector.broadcast %14 : vector<1x1024xf32> to vector<16x1024xf32>
      %16 = arith.addf %13, %15 : vector<16x1024xf32>
      %cst_14 = arith.constant 0.000000e+00 : f32
      %17 = vector.broadcast %cst_14 : f32 to vector<16x1024xf32>
      %18 = arith.maximumf %16, %17 : vector<16x1024xf32>
      %19 = arith.truncf %18 : vector<16x1024xf32> to vector<16x1024xbf16>
      %c0_15 = arith.constant 0 : index
      %c0_16 = arith.constant 0 : index
      %20 = vector.load %arg5[%c0_15, %c0_16] : memref<1024x128xbf16, #tpu.memory_space<vmem>>, vector<1024x128xbf16>
      %cst_17 = arith.constant dense<0.000000e+00> : vector<16x128xf32>
      %21 = tpu.matmul %19, %20, %cst_17 {dimension_numbers = #tpu.dot_dimension_numbers<[1], [0], [0], [1], [0, 0, 1, 1], [], []>} : vector<16x1024xbf16>, vector<1024x128xbf16>, vector<16x128xf32> -> vector<16x128xf32>
      %c0_18 = arith.constant 0 : index
      %c0_19 = arith.constant 0 : index
      %22 = vector.load %arg6[%c0_18, %c0_19] : memref<1x128xf32, #tpu.memory_space<vmem>>, vector<1x128xf32>
      %23 = vector.broadcast %22 : vector<1x128xf32> to vector<16x128xf32>
      %24 = arith.addf %21, %23 : vector<16x128xf32>
      %c0_20 = arith.constant 0 : index
      %c0_21 = arith.constant 0 : index
      %25 = vector.load %arg7[%c0_20, %c0_21] : memref<16x128xf32, #tpu.memory_space<vmem>>, vector<16x128xf32>
      tpu.vector_store %arg7[%c0_20, %c0_21], %24 {strides = array<i32>} : memref<16x128xf32, #tpu.memory_space<vmem>>, vector<16x128xf32>,
    } else {
    }
    return
  }
  func.func @transform_0(%arg0: i32, %arg1: i32) -> (i32, i32) {
    %c0_i32 = arith.constant 0 : i32
    return %arg0, %arg1 : i32, i32
  }
  func.func @transform_1(%arg0: i32, %arg1: i32) -> (i32, i32) {
    %c0_i32 = arith.constant 0 : i32
    %c0_i32_0 = arith.constant 0 : i32
    return %arg1, %c0_i32 : i32, i32
  }
  func.func @transform_2(%arg0: i32, %arg1: i32) -> (i32, i32) {
    %c0_i32 = arith.constant 0 : i32
    %c0_i32_0 = arith.constant 0 : i32
    %c0_i32_1 = arith.constant 0 : i32
    return %c0_i32, %c0_i32_0 : i32, i32
  }
  func.func @transform_3(%arg0: i32, %arg1: i32) -> (i32, i32) {
    %c0_i32 = arith.constant 0 : i32
    %c0_i32_0 = arith.constant 0 : i32
    %c0_i32_1 = arith.constant 0 : i32
    return %c0_i32, %c0_i32_0 : i32, i32
  }
  func.func @transform_4(%arg0: i32, %arg1: i32) -> (i32, i32) {
    %c0_i32 = arith.constant 0 : i32
    %c0_i32_0 = arith.constant 0 : i32
    %c0_i32_1 = arith.constant 0 : i32
    return %c0_i32, %c0_i32_0 : i32, i32
  }
  func.func @transform_5(%arg0: i32, %arg1: i32) -> (i32, i32) {
    %c0_i32 = arith.constant 0 : i32
    %c0_i32_0 = arith.constant 0 : i32
    return %arg0, %c0_i32 : i32, i32
  }
}

</mosaic_0001>

<llo_original>
// kernel: view_classifier_forward.1
$region0: #{view_classifier_forward.1}
  #allocation0 [shape = 'u32[]', space=smem, size = 0x4, offset = 0x4, fixed_abs, tag = 'smem constant byte address 0x4 - core index']
  #allocation1 [shape = 'u32[144,128]{1,0:T(1,128)}', space=vmem, size = 0x12000, scoped, tag = 'internal scratch']
  #allocation2 [shape = 'f32[16,1024]{1,0:T(8,128)}', space=vmem, size = 0x10000, scoped, tag = 'scratch operand']
  %s0 = inlined_call_operand.hbm [shape: f32[16,64], index: 0, kind: input, shape index: {}]
  %s1 = inlined_call_operand.hbm [shape: bf16[64,1024], index: 1, kind: input, shape index: {}]
  %s2 = inlined_call_operand.hbm [shape: f32[1,1024], index: 2, kind: input, shape index: {}]
  %s3 = inlined_call_operand.hbm [shape: bf16[1024,128], index: 3, kind: input, shape index: {}]
  %s4 = inlined_call_operand.vmem [shape: f32[1,128], index: 4, kind: input, shape index: {}]
  %s5 = inlined_call_operand.vmem [shape: f32[16,128], index: 5, kind: output, shape index: {}]
  %s6 = sld [smem:[#allocation0]]
  $region54: #{view_classifier_forward.1} parent=0
    _
  %s8 = ssub.s32 1, %s6
  %s9 = scalar_select 0, %s8, %s6
  $region1: #{view_classifier_forward.1} parent=0
    #allocation3 [shape = 'u8[8192]{0}', space=vmem, size = 0x2000, scoped, tag = 'input window, operand 0, single buffered']
    #allocation4 [shape = 's32[1]{0}', space=sflag, size = 0x4, scoped, tag = 'scoped memory for view_classifier_forward.1']
    #allocation5 [shape = 'u8[131072]{0}', space=vmem, size = 0x20000, scoped, tag = 'input window, operand 1, single buffered']
    #allocation6 [shape = 's32[1]{0}', space=sflag, size = 0x4, scoped, tag = 'scoped memory for view_classifier_forward.1']
    #allocation7 [shape = 'u8[4096]{0}', space=vmem, size = 0x1000, scoped, tag = 'input window, operand 2, single buffered']
    #allocation8 [shape = 'u8[262144]{0}', space=vmem, size = 0x40000, scoped, tag = 'input window, operand 3, single buffered']
    #allocation9 [shape = 's32[1]{0}', space=sflag, size = 0x4, scoped, tag = 'scoped memory for view_classifier_forward.1']
    %10 = vsyncpa [#allocation4], 0
    %11 = vsyncpa [#allocation6], 0
    %12 = vsyncpa [#allocation9], 0
    // Predicated region
    $region2: #{view_classifier_forward.1} parent=1 // pred_check
      _
    $region3: #{view_classifier_forward.1} parent=1 // pred_check_branch
      %14 = sbr.rel (0) target = $region5
    $region4: #{view_classifier_forward.1} parent=1 // pred_region
      %s16 = ssub.s32 256, 256
      %17 = vsyncadd [#allocation4], %s16
      %s18 = sshll.u32 [#allocation3], 4
      %s19 = int_to_ptr.vmem [resolvable:$true] %s18
      %24 = dma.hbm_to_vmem [thread:$0]  %s0, 256, %s19, [#allocation4], 128, 128, 8
    $region5: #{view_classifier_forward.1} parent=1 // pred_fallthru
      _
    // Predicated region
    $region6: #{view_classifier_forward.1} parent=1 // pred_check
      _
    $region7: #{view_classifier_forward.1} parent=1 // pred_check_branch
      %26 = sbr.rel (0) target = $region9
    $region8: #{view_classifier_forward.1} parent=1 // pred_region
      %s28 = ssub.s32 4096, 4096
      %29 = vsyncadd [#allocation6], %s28
      %s30 = sshll.u32 [#allocation5], 4
      %s31 = int_to_ptr.vmem [resolvable:$true] %s30
      %36 = dma.hbm_to_vmem [thread:$0]  %s1, 4096, %s31, [#allocation6], 512, 512, 32
    $region9: #{view_classifier_forward.1} parent=1 // pred_fallthru
      _
    // Predicated region
    $region10: #{view_classifier_forward.1} parent=1 // pred_check
      _
    $region11: #{view_classifier_forward.1} parent=1 // pred_check_branch
      %38 = sbr.rel (0) target = $region13
    $region12: #{view_classifier_forward.1} parent=1 // pred_region
      %s40 = ssub.s32 128, 128
      %41 = vsyncadd [#allocation6], %s40
      %s43 = sshll.u32 [#allocation7], 4
      %s44 = int_to_ptr.vmem [resolvable:$true] %s43
      %46 = dma.hbm_to_vmem [thread:$0]  %s2, 128, %s44, [#allocation6]
    $region13: #{view_classifier_forward.1} parent=1 // pred_fallthru
      _
    // Predicated region
    $region14: #{view_classifier_forward.1} parent=1 // pred_check
      _
    $region15: #{view_classifier_forward.1} parent=1 // pred_check_branch
      %48 = sbr.rel (0) target = $region17
    $region16: #{view_classifier_forward.1} parent=1 // pred_region
      %s50 = ssub.s32 8192, 8192
      %51 = vsyncadd [#allocation9], %s50
      %s52 = sshll.u32 [#allocation8], 4
      %s53 = int_to_ptr.vmem [resolvable:$true] %s52
      %58 = dma.hbm_to_vmem [thread:$0]  %s3, 8192, %s53, [#allocation9], 64, 64, 4
    $region17: #{view_classifier_forward.1} parent=1 // pred_fallthru
      _
    // Predicated region
    $region18: #{view_classifier_forward.1} parent=1 // pred_check
      _
    $region19: #{view_classifier_forward.1} parent=1 // pred_check_branch
      %60 = sbr.rel (0) target = $region21
    $region20: #{view_classifier_forward.1} parent=1 // pred_region
      _
    $region21: #{view_classifier_forward.1} parent=1 // pred_fallthru
      _
    // Predicated region
    $region22: #{view_classifier_forward.1} parent=1 // pred_check
      _
    $region23: #{view_classifier_forward.1} parent=1 // pred_check_branch
      %62 = sbr.rel (0) target = $region25
    $region24: #{view_classifier_forward.1} parent=1 // pred_region
      %63 = dma.done [#allocation4], 256
    $region25: #{view_classifier_forward.1} parent=1 // pred_fallthru
      _
    // Predicated region
    $region26: #{view_classifier_forward.1} parent=1 // pred_check
      _
    $region27: #{view_classifier_forward.1} parent=1 // pred_check_branch
      %65 = sbr.rel (0) target = $region29
    $region28: #{view_classifier_forward.1} parent=1 // pred_region
      %66 = dma.done [#allocation6], 4096
    $region29: #{view_classifier_forward.1} parent=1 // pred_fallthru
      _
    // Predicated region
    $region30: #{view_classifier_forward.1} parent=1 // pred_check
      _
    $region31: #{view_classifier_forward.1} parent=1 // pred_check_branch
      %68 = sbr.rel (0) target = $region33
    $region32: #{view_classifier_forward.1} parent=1 // pred_region
      %69 = dma.done [#allocation6], 128
    $region33: #{view_classifier_forward.1} parent=1 // pred_fallthru
      _
    // Predicated region
    $region34: #{view_classifier_forward.1} parent=1 // pred_check
      _
    $region35: #{view_classifier_forward.1} parent=1 // pred_check_branch
      %71 = sbr.rel (0) target = $region37
    $region36: #{view_classifier_forward.1} parent=1 // pred_region
      %72 = dma.done [#allocation9], 8192
    $region37: #{view_classifier_forward.1} parent=1 // pred_fallthru
      _
    %p74 = scmp.eq.s32.totalorder 0, 0
    // Predicated region
    $region38: #{view_classifier_forward.1} parent=1 // pred_check
      %p75 = pneg %p74
    $region39: #{view_classifier_forward.1} parent=1 // pred_check_branch
      %77 = sbr.rel (%p75) target = $region41
    $region40: #{view_classifier_forward.1} parent=1 // pred_region
      %78 = vst [vmem:[#allocation2] sm:$0xff] 0.0
      %79 = vst [vmem:[#allocation2 + $0x8] sm:$0xff] 0.0
      %80 = vst [vmem:[#allocation2 + $0x10] sm:$0xff] 0.0
      %81 = vst [vmem:[#allocation2 + $0x18] sm:$0xff] 0.0
      %82 = vst [vmem:[#allocation2 + $0x20] sm:$0xff] 0.0
      %83 = vst [vmem:[#allocation2 + $0x28] sm:$0xff] 0.0
      %84 = vst [vmem:[#allocation2 + $0x30] sm:$0xff] 0.0
      %85 = vst [vmem:[#allocation2 + $0x38] sm:$0xff] 0.0
      %86 = vst [vmem:[#allocation2 + $0x40] sm:$0xff] 0.0
      %87 = vst [vmem:[#allocation2 + $0x48] sm:$0xff] 0.0
      %88 = vst [vmem:[#allocation2 + $0x50] sm:$0xff] 0.0
      %89 = vst [vmem:[#allocation2 + $0x58] sm:$0xff] 0.0
      %90 = vst [vmem:[#allocation2 + $0x60] sm:$0xff] 0.0
      %91 = vst [vmem:[#allocation2 + $0x68] sm:$0xff] 0.0
      %92 = vst [vmem:[#allocation2 + $0x70] sm:$0xff] 0.0
      %93 = vst [vmem:[#allocation2 + $0x78] sm:$0xff] 0.0
    $region41: #{view_classifier_forward.1} parent=1 // pred_fallthru
      _
    %v94 = vld [vmem:[#allocation2] sm:$0xff]
    %v95 = vld [vmem:[#allocation2 + $0x8] sm:$0xff]
    %v96 = vld [vmem:[#allocation2 + $0x10] sm:$0xff]
    %v97 = vld [vmem:[#allocation2 + $0x18] sm:$0xff]
    %v98 = vld [vmem:[#allocation2 + $0x20] sm:$0xff]
    %v99 = vld [vmem:[#allocation2 + $0x28] sm:$0xff]
    %v100 = vld [vmem:[#allocation2 + $0x30] sm:$0xff]
    %v101 = vld [vmem:[#allocation2 + $0x38] sm:$0xff]
    %v102 = vld [vmem:[#allocation2 + $0x40] sm:$0xff]
    %v103 = vld [vmem:[#allocation2 + $0x48] sm:$0xff]
    %v104 = vld [vmem:[#allocation2 + $0x50] sm:$0xff]
    %v105 = vld [vmem:[#allocation2 + $0x58] sm:$0xff]
    %v106 = vld [vmem:[#allocation2 + $0x60] sm:$0xff]
    %v107 = vld [vmem:[#allocation2 + $0x68] sm:$0xff]
    %v108 = vld [vmem:[#allocation2 + $0x70] sm:$0xff]
    %v109 = vld [vmem:[#allocation2 + $0x78] sm:$0xff]
    %v110 = vld [vmem:[#allocation3] sm:$0xff]
    %v111 = vld [vmem:[#allocation3 + $0x8] sm:$0xff]
    %v112 = vpack.c.bf16 %v111, %v110
    %v113 = vld [vmem:[#allocation5] sm:$0xff]
    %v114 = vld [vmem:[#allocation5 + $0x8] sm:$0xff]
    %v115 = vld [vmem:[#allocation5 + $0x10] sm:$0xff]
    %v116 = vld [vmem:[#allocation5 + $0x18] sm:$0xff]
    %v117 = vld [vmem:[#allocation5 + $0x20] sm:$0xff]
    %v118 = vld [vmem:[#allocation5 + $0x28] sm:$0xff]
    %v119 = vld [vmem:[#allocation5 + $0x30] sm:$0xff]
    %v120 = vld [vmem:[#allocation5 + $0x38] sm:$0xff]
    %v121 = vld [vmem:[#allocation5 + $0x40] sm:$0xff]
    %v122 = vld [vmem:[#allocation5 + $0x48] sm:$0xff]
    %v123 = vld [vmem:[#allocation5 + $0x50] sm:$0xff]
    %v124 = vld [vmem:[#allocation5 + $0x58] sm:$0xff]
    %v125 = vld [vmem:[#allocation5 + $0x60] sm:$0xff]
    %v126 = vld [vmem:[#allocation5 + $0x68] sm:$0xff]
    %v127 = vld [vmem:[#allocation5 + $0x70] sm:$0xff]
    %v128 = vld [vmem:[#allocation5 + $0x78] sm:$0xff]
    %v129 = vld [vmem:[#allocation5 + $0x80] sm:$0xff]
    %v130 = vld [vmem:[#allocation5 + $0x88] sm:$0xff]
    %v131 = vld [vmem:[#allocation5 + $0x90] sm:$0xff]
    %v132 = vld [vmem:[#allocation5 + $0x98] sm:$0xff]
    %v133 = vld [vmem:[#allocation5 + $0xa0] sm:$0xff]
    %v134 = vld [vmem:[#allocation5 + $0xa8] sm:$0xff]
    %v135 = vld [vmem:[#allocation5 + $0xb0] sm:$0xff]
    %v136 = vld [vmem:[#allocation5 + $0xb8] sm:$0xff]
    %v137 = vld [vmem:[#allocation5 + $0xc0] sm:$0xff]
    %v138 = vld [vmem:[#allocation5 + $0xc8] sm:$0xff]
    %v139 = vld [vmem:[#allocation5 + $0xd0] sm:$0xff]
    %v140 = vld [vmem:[#allocation5 + $0xd8] sm:$0xff]
    %v141 = vld [vmem:[#allocation5 + $0xe0] sm:$0xff]
    %v142 = vld [vmem:[#allocation5 + $0xe8] sm:$0xff]
    %v143 = vld [vmem:[#allocation5 + $0xf0] sm:$0xff]
    %v144 = vld [vmem:[#allocation5 + $0xf8] sm:$0xff]
    %v177 = vunpack.c.l.b16 %v113
    %v178 = vunpack.c.h.b16 %v113
    %v179 = vunpack.c.l.b16 %v114
    %v180 = vunpack.c.h.b16 %v114
    %v181 = vunpack.c.l.b16 %v115
    %v182 = vunpack.c.h.b16 %v115
    %v183 = vunpack.c.l.b16 %v116
    %v184 = vunpack.c.h.b16 %v116
    %v185 = vunpack.c.l.b16 %v117
    %v186 = vunpack.c.h.b16 %v117
    %v187 = vunpack.c.l.b16 %v118
    %v188 = vunpack.c.h.b16 %v118
    %v189 = vunpack.c.l.b16 %v119
    %v190 = vunpack.c.h.b16 %v119
    %v191 = vunpack.c.l.b16 %v120
    %v192 = vunpack.c.h.b16 %v120
    %v193 = vunpack.c.l.b16 %v121
    %v194 = vunpack.c.h.b16 %v121
    %v195 = vunpack.c.l.b16 %v122
    %v196 = vunpack.c.h.b16 %v122
    %v197 = vunpack.c.l.b16 %v123
    %v198 = vunpack.c.h.b16 %v123
    %v199 = vunpack.c.l.b16 %v124
    %v200 = vunpack.c.h.b16 %v124
    %v201 = vunpack.c.l.b16 %v125
    %v202 = vunpack.c.h.b16 %v125
    %v203 = vunpack.c.l.b16 %v126
    %v204 = vunpack.c.h.b16 %v126
    %v205 = vunpack.c.l.b16 %v127
    %v206 = vunpack.c.h.b16 %v127
    %v207 = vunpack.c.l.b16 %v128
    %v208 = vunpack.c.h.b16 %v128
    %v209 = vunpack.c.l.b16 %v129
    %v210 = vunpack.c.h.b16 %v129
    %v211 = vunpack.c.l.b16 %v130
    %v212 = vunpack.c.h.b16 %v130
    %v213 = vunpack.c.l.b16 %v131
    %v214 = vunpack.c.h.b16 %v131
    %v215 = vunpack.c.l.b16 %v132
    %v216 = vunpack.c.h.b16 %v132
    %v217 = vunpack.c.l.b16 %v133
    %v218 = vunpack.c.h.b16 %v133
    %v219 = vunpack.c.l.b16 %v134
    %v220 = vunpack.c.h.b16 %v134
    %v221 = vunpack.c.l.b16 %v135
    %v222 = vunpack.c.h.b16 %v135
    %v223 = vunpack.c.l.b16 %v136
    %v224 = vunpack.c.h.b16 %v136
    %v225 = vunpack.c.l.b16 %v137
    %v226 = vunpack.c.h.b16 %v137
    %v227 = vunpack.c.l.b16 %v138
    %v228 = vunpack.c.h.b16 %v138
    %v229 = vunpack.c.l.b16 %v139
    %v230 = vunpack.c.h.b16 %v139
    %v231 = vunpack.c.l.b16 %v140
    %v232 = vunpack.c.h.b16 %v140
    %v233 = vunpack.c.l.b16 %v141
    %v234 = vunpack.c.h.b16 %v141
    %v235 = vunpack.c.l.b16 %v142
    %v236 = vunpack.c.h.b16 %v142
    %v237 = vunpack.c.l.b16 %v143
    %v238 = vunpack.c.h.b16 %v143
    %v239 = vunpack.c.l.b16 %v144
    %v240 = vunpack.c.h.b16 %v144
    %v241 = vpack.c.b16 %v185, %v177
    %v242 = vpack.c.b16 %v186, %v178
    %v243 = vpack.c.b16 %v187, %v179
    %v244 = vpack.c.b16 %v188, %v180
    %v245 = vpack.c.b16 %v189, %v181
    %v246 = vpack.c.b16 %v190, %v182
    %v247 = vpack.c.b16 %v191, %v183
    %v248 = vpack.c.b16 %v192, %v184
    %v249 = vpack.c.b16 %v201, %v193
    %v250 = vpack.c.b16 %v202, %v194
    %v251 = vpack.c.b16 %v203, %v195
    %v252 = vpack.c.b16 %v204, %v196
    %v253 = vpack.c.b16 %v205, %v197
    %v254 = vpack.c.b16 %v206, %v198
    %v255 = vpack.c.b16 %v207, %v199
    %v256 = vpack.c.b16 %v208, %v200
    %v257 = vpack.c.b16 %v217, %v209
    %v258 = vpack.c.b16 %v218, %v210
    %v259 = vpack.c.b16 %v219, %v211
    %v260 = vpack.c.b16 %v220, %v212
    %v261 = vpack.c.b16 %v221, %v213
    %v262 = vpack.c.b16 %v222, %v214
    %v263 = vpack.c.b16 %v223, %v215
    %v264 = vpack.c.b16 %v224, %v216
    %v265 = vpack.c.b16 %v233, %v225
    %v266 = vpack.c.b16 %v234, %v226
    %v267 = vpack.c.b16 %v235, %v227
    %v268 = vpack.c.b16 %v236, %v228
    %v269 = vpack.c.b16 %v237, %v229
    %v270 = vpack.c.b16 %v238, %v230
    %v271 = vpack.c.b16 %v239, %v231
    %v272 = vpack.c.b16 %v240, %v232
    %vm305 = vcmask 523264
    %v307 = vsel %vm305, %v112, 0
    %309 = vmatprep.subr.bf16.mxu0 0
    %310 = vmatpush1.bf16.msra.mxu0 0
    %311 = vmatprep.subr.bf16.mxu0 0
    %312 = vmatpush1.bf16.msra.mxu0 0
    %313 = vmatprep.subr.bf16.mxu0 0
    %314 = vmatpush1.bf16.msra.mxu0 0
    %315 = vmatprep.subr.bf16.mxu0 0
    %316 = vmatpush1.bf16.msra.mxu0 0
    %317 = vmatprep.subr.bf16.mxu0 %v266
    %318 = vmatpush1.bf16.msra.mxu0 %v265
    %319 = vmatprep.subr.bf16.mxu0 %v258
    %320 = vmatpush1.bf16.msra.mxu0 %v257
    %321 = vmatprep.subr.bf16.mxu0 %v250
    %322 = vmatpush1.bf16.msra.mxu0 %v249
    %323 = vmatprep.subr.bf16.mxu0 %v242
    %324 = vmatpush1.bf16.msra.mxu0 %v241
    %325 = vmatprep.subr.bf16.mxu0 0
    %326 = vmatpush2.bf16.msra.mxu0 0
    %327 = vmatprep.subr.bf16.mxu0 0
    %328 = vmatpush2.bf16.msra.mxu0 0
    %329 = vmatprep.subr.bf16.mxu0 0
    %330 = vmatpush2.bf16.msra.mxu0 0
    %331 = vmatprep.subr.bf16.mxu0 0
    %332 = vmatpush2.bf16.msra.mxu0 0
    %333 = vmatprep.subr.bf16.mxu0 0
    %334 = vmatpush2.bf16.msra.mxu0 0
    %335 = vmatprep.subr.bf16.mxu0 0
    %336 = vmatpush2.bf16.msra.mxu0 0
    %337 = vmatprep.subr.bf16.mxu0 0
    %338 = vmatpush2.bf16.msra.mxu0 0
    %339 = vmatprep.subr.bf16.mxu0 0
    %340 = vmatpush2.bf16.msra.mxu0 0
    %341 = vmatprep.mubr.bf16.mxu0 0
    %342 = vmatmul.mubr.bf16.gmra.mxu0 %v307
    %v343 = vpop.f32.mrf.mxu0
    %v344 = vadd.f32 0.0, %v343
    %v345 = vpop.f32.mrf.mxu0
    %v346 = vadd.f32 0.0, %v345
    %v347 = vpop.f32.mrf.mxu0
    %v348 = vadd.f32 0.0, %v347
    %v349 = vpop.f32.mrf.mxu0
    %v350 = vadd.f32 0.0, %v349
    %351 = vdwg.mxu0
    %352 = vmatprep.subr.bf16.mxu0 0
    %353 = vmatpush1.bf16.msra.mxu0 0
    %354 = vmatprep.subr.bf16.mxu0 0
    %355 = vmatpush1.bf16.msra.mxu0 0
    %356 = vmatprep.subr.bf16.mxu0 0
    %357 = vmatpush1.bf16.msra.mxu0 0
    %358 = vmatprep.subr.bf16.mxu0 0
    %359 = vmatpush1.bf16.msra.mxu0 0
    %360 = vmatprep.subr.bf16.mxu0 %v268
    %361 = vmatpush1.bf16.msra.mxu0 %v267
    %362 = vmatprep.subr.bf16.mxu0 %v260
    %363 = vmatpush1.bf16.msra.mxu0 %v259
    %364 = vmatprep.subr.bf16.mxu0 %v252
    %365 = vmatpush1.bf16.msra.mxu0 %v251
    %366 = vmatprep.subr.bf16.mxu0 %v244
    %367 = vmatpush1.bf16.msra.mxu0 %v243
    %368 = vmatprep.subr.bf16.mxu0 0
    %369 = vmatpush2.bf16.msra.mxu0 0
    %370 = vmatprep.subr.bf16.mxu0 0
    %371 = vmatpush2.bf16.msra.mxu0 0
    %372 = vmatprep.subr.bf16.mxu0 0
    %373 = vmatpush2.bf16.msra.mxu0 0
    %374 = vmatprep.subr.bf16.mxu0 0
    %375 = vmatpush2.bf16.msra.mxu0 0
    %376 = vmatprep.subr.bf16.mxu0 0
    %377 = vmatpush2.bf16.msra.mxu0 0
    %378 = vmatprep.subr.bf16.mxu0 0
    %379 = vmatpush2.bf16.msra.mxu0 0
    %380 = vmatprep.subr.bf16.mxu0 0
    %381 = vmatpush2.bf16.msra.mxu0 0
    %382 = vmatprep.subr.bf16.mxu0 0
    %383 = vmatpush2.bf16.msra.mxu0 0
    %384 = vmatprep.mubr.bf16.mxu0 0
    %385 = vmatmul.mubr.bf16.gmra.mxu0 %v307
    %v386 = vpop.f32.mrf.mxu0
    %v387 = vadd.f32 0.0, %v386
    %v388 = vpop.f32.mrf.mxu0
    %v389 = vadd.f32 0.0, %v388
    %v390 = vpop.f32.mrf.mxu0
    %v391 = vadd.f32 0.0, %v390
    %v392 = vpop.f32.mrf.mxu0
    %v393 = vadd.f32 0.0, %v392
    %394 = vdwg.mxu0
    %395 = vmatprep.subr.bf16.mxu0 0
    %396 = vmatpush1.bf16.msra.mxu0 0
    %397 = vmatprep.subr.bf16.mxu0 0
    %398 = vmatpush1.bf16.msra.mxu0 0
    %399 = vmatprep.subr.bf16.mxu0 0
    %400 = vmatpush1.bf16.msra.mxu0 0
    %401 = vmatprep.subr.bf16.mxu0 0
    %402 = vmatpush1.bf16.msra.mxu0 0
    %403 = vmatprep.subr.bf16.mxu0 %v270
    %404 = vmatpush1.bf16.msra.mxu0 %v269
    %405 = vmatprep.subr.bf16.mxu0 %v262
    %406 = vmatpush1.bf16.msra.mxu0 %v261
    %407 = vmatprep.subr.bf16.mxu0 %v254
    %408 = vmatpush1.bf16.msra.mxu0 %v253
    %409 = vmatprep.subr.bf16.mxu0 %v246
    %410 = vmatpush1.bf16.msra.mxu0 %v245
    %411 = vmatprep.subr.bf16.mxu0 0
    %412 = vmatpush2.bf16.msra.mxu0 0
    %413 = vmatprep.subr.bf16.mxu0 0
    %414 = vmatpush2.bf16.msra.mxu0 0
    %415 = vmatprep.subr.bf16.mxu0 0
    %416 = vmatpush2.bf16.msra.mxu0 0
    %417 = vmatprep.subr.bf16.mxu0 0
    %418 = vmatpush2.bf16.msra.mxu0 0
    %419 = vmatprep.subr.bf16.mxu0 0
    %420 = vmatpush2.bf16.msra.mxu0 0
    %421 = vmatprep.subr.bf16.mxu0 0
    %422 = vmatpush2.bf16.msra.mxu0 0
    %423 = vmatprep.subr.bf16.mxu0 0
    %424 = vmatpush2.bf16.msra.mxu0 0
    %425 = vmatprep.subr.bf16.mxu0 0
    %426 = vmatpush2.bf16.msra.mxu0 0
    %427 = vmatprep.mubr.bf16.mxu0 0
    %428 = vmatmul.mubr.bf16.gmra.mxu0 %v307
    %v429 = vpop.f32.mrf.mxu0
    %v430 = vadd.f32 0.0, %v429
    %v431 = vpop.f32.mrf.mxu0
    %v432 = vadd.f32 0.0, %v431
    %v433 = vpop.f32.mrf.mxu0
    %v434 = vadd.f32 0.0, %v433
    %v435 = vpop.f32.mrf.mxu0
    %v436 = vadd.f32 0.0, %v435
    %437 = vdwg.mxu0
    %438 = vmatprep.subr.bf16.mxu0 0
    %439 = vmatpush1.bf16.msra.mxu0 0
    %440 = vmatprep.subr.bf16.mxu0 0
    %441 = vmatpush1.bf16.msra.mxu0 0
    %442 = vmatprep.subr.bf16.mxu0 0
    %443 = vmatpush1.bf16.msra.mxu0 0
    %444 = vmatprep.subr.bf16.mxu0 0
    %445 = vmatpush1.bf16.msra.mxu0 0
    %446 = vmatprep.subr.bf16.mxu0 %v272
    %447 = vmatpush1.bf16.msra.mxu0 %v271
    %448 = vmatprep.subr.bf16.mxu0 %v264
    %449 = vmatpush1.bf16.msra.mxu0 %v263
    %450 = vmatprep.subr.bf16.mxu0 %v256
    %451 = vmatpush1.bf16.msra.mxu0 %v255
    %452 = vmatprep.subr.bf16.mxu0 %v248
    %453 = vmatpush1.bf16.msra.mxu0 %v247
    %454 = vmatprep.subr.bf16.mxu0 0
    %455 = vmatpush2.bf16.msra.mxu0 0
    %456 = vmatprep.subr.bf16.mxu0 0
    %457 = vmatpush2.bf16.msra.mxu0 0
    %458 = vmatprep.subr.bf16.mxu0 0
    %459 = vmatpush2.bf16.msra.mxu0 0
    %460 = vmatprep.subr.bf16.mxu0 0
    %461 = vmatpush2.bf16.msra.mxu0 0
    %462 = vmatprep.subr.bf16.mxu0 0
    %463 = vmatpush2.bf16.msra.mxu0 0
    %464 = vmatprep.subr.bf16.mxu0 0
    %465 = vmatpush2.bf16.msra.mxu0 0
    %466 = vmatprep.subr.bf16.mxu0 0
    %467 = vmatpush2.bf16.msra.mxu0 0
    %468 = vmatprep.subr.bf16.mxu0 0
    %469 = vmatpush2.bf16.msra.mxu0 0
    %470 = vmatprep.mubr.bf16.mxu0 0
    %471 = vmatmul.mubr.bf16.gmra.mxu0 %v307
    %v472 = vpop.f32.mrf.mxu0
    %v473 = vadd.f32 0.0, %v472
    %v474 = vpop.f32.mrf.mxu0
    %v475 = vadd.f32 0.0, %v474
    %v476 = vpop.f32.mrf.mxu0
    %v477 = vadd.f32 0.0, %v476
    %v478 = vpop.f32.mrf.mxu0
    %v479 = vadd.f32 0.0, %v478
    %480 = vdwg.mxu0
    %v481 = vadd.f32 %v94, %v344
    %v482 = vadd.f32 %v95, %v346
    %v483 = vadd.f32 %v96, %v387
    %v484 = vadd.f32 %v97, %v389
    %v485 = vadd.f32 %v98, %v430
    %v486 = vadd.f32 %v99, %v432
    %v487 = vadd.f32 %v100, %v473
    %v488 = vadd.f32 %v101, %v475
    %v489 = vadd.f32 %v102, %v348
    %v490 = vadd.f32 %v103, %v350
    %v491 = vadd.f32 %v104, %v391
    %v492 = vadd.f32 %v105, %v393
    %v493 = vadd.f32 %v106, %v434
    %v494 = vadd.f32 %v107, %v436
    %v495 = vadd.f32 %v108, %v477
    %v496 = vadd.f32 %v109, %v479
    %497 = vst [vmem:[#allocation2] sm:$0xff] %v481
    %498 = vst [vmem:[#allocation2 + $0x8] sm:$0xff] %v482
    %499 = vst [vmem:[#allocation2 + $0x10] sm:$0xff] %v483
    %500 = vst [vmem:[#allocation2 + $0x18] sm:$0xff] %v484
    %501 = vst [vmem:[#allocation2 + $0x20] sm:$0xff] %v485
    %502 = vst [vmem:[#allocation2 + $0x28] sm:$0xff] %v486
    %503 = vst [vmem:[#allocation2 + $0x30] sm:$0xff] %v487
    %504 = vst [vmem:[#allocation2 + $0x38] sm:$0xff] %v488
    %505 = vst [vmem:[#allocation2 + $0x40] sm:$0xff] %v489
    %506 = vst [vmem:[#allocation2 + $0x48] sm:$0xff] %v490
    %507 = vst [vmem:[#allocation2 + $0x50] sm:$0xff] %v491
    %508 = vst [vmem:[#allocation2 + $0x58] sm:$0xff] %v492
    %509 = vst [vmem:[#allocation2 + $0x60] sm:$0xff] %v493
    %510 = vst [vmem:[#allocation2 + $0x68] sm:$0xff] %v494
    %511 = vst [vmem:[#allocation2 + $0x70] sm:$0xff] %v495
    %512 = vst [vmem:[#allocation2 + $0x78] sm:$0xff] %v496
    // Predicated region
    $region42: #{view_classifier_forward.1} parent=1 // pred_check
      %p513 = pneg %p74
    $region43: #{view_classifier_forward.1} parent=1 // pred_check_branch
      %515 = sbr.rel (%p513) target = $region45
    $region44: #{view_classifier_forward.1} parent=1 // pred_region
      %v516 = vld [vmem:[#allocation2] sm:$0xff]
      %v517 = vld [vmem:[#allocation2 + $0x8] sm:$0xff]
      %v518 = vld [vmem:[#allocation2 + $0x10] sm:$0xff]
      %v519 = vld [vmem:[#allocation2 + $0x18] sm:$0xff]
      %v520 = vld [vmem:[#allocation2 + $0x20] sm:$0xff]
      %v521 = vld [vmem:[#allocation2 + $0x28] sm:$0xff]
      %v522 = vld [vmem:[#allocation2 + $0x30] sm:$0xff]
      %v523 = vld [vmem:[#allocation2 + $0x38] sm:$0xff]
      %v524 = vld [vmem:[#allocation2 + $0x40] sm:$0xff]
      %v525 = vld [vmem:[#allocation2 + $0x48] sm:$0xff]
      %v526 = vld [vmem:[#allocation2 + $0x50] sm:$0xff]
      %v527 = vld [vmem:[#allocation2 + $0x58] sm:$0xff]
      %v528 = vld [vmem:[#allocation2 + $0x60] sm:$0xff]
      %v529 = vld [vmem:[#allocation2 + $0x68] sm:$0xff]
      %v530 = vld [vmem:[#allocation2 + $0x70] sm:$0xff]
      %v531 = vld [vmem:[#allocation2 + $0x78] sm:$0xff]
      %v532 = vld [vmem:[#allocation7] sm:$0xff]
      %v534 = vlaneseq
      %v535 = vshrl.u32 %v534, 7
      %v536 = vsub.s32 0, %v535
      %v537 = vrot.slane %v532, %v536
      %v538 = vlaneseq
      %v539 = vshrl.u32 %v538, 7
      %v540 = vsub.s32 1, %v539
      %v541 = vrot.slane %v532, %v540
      %v542 = vlaneseq
      %v543 = vshrl.u32 %v542, 7
      %v544 = vsub.s32 2, %v543
      %v545 = vrot.slane %v532, %v544
      %v546 = vlaneseq
      %v547 = vshrl.u32 %v546, 7
      %v548 = vsub.s32 3, %v547
      %v549 = vrot.slane %v532, %v548
      %v550 = vlaneseq
      %v551 = vshrl.u32 %v550, 7
      %v552 = vsub.s32 4, %v551
      %v553 = vrot.slane %v532, %v552
      %v554 = vlaneseq
      %v555 = vshrl.u32 %v554, 7
      %v556 = vsub.s32 5, %v555
      %v557 = vrot.slane %v532, %v556
      %v558 = vlaneseq
      %v559 = vshrl.u32 %v558, 7
      %v560 = vsub.s32 6, %v559
      %v561 = vrot.slane %v532, %v560
      %v562 = vlaneseq
      %v563 = vshrl.u32 %v562, 7
      %v564 = vsub.s32 7, %v563
      %v565 = vrot.slane %v532, %v564
      %v574 = vadd.f32 %v516, %v537
      %v575 = vadd.f32 %v517, %v541
      %v576 = vadd.f32 %v518, %v545
      %v577 = vadd.f32 %v519, %v549
      %v578 = vadd.f32 %v520, %v553
      %v579 = vadd.f32 %v521, %v557
      %v580 = vadd.f32 %v522, %v561
      %v581 = vadd.f32 %v523, %v565
      %v582 = vadd.f32 %v524, %v537
      %v583 = vadd.f32 %v525, %v541
      %v584 = vadd.f32 %v526, %v545
      %v585 = vadd.f32 %v527, %v549
      %v586 = vadd.f32 %v528, %v553
      %v587 = vadd.f32 %v529, %v557
      %v588 = vadd.f32 %v530, %v561
      %v589 = vadd.f32 %v531, %v565
      %v590 = vmax.f32 %v574, 0.0
      %v591 = vmax.f32 %v575, 0.0
      %v592 = vmax.f32 %v576, 0.0
      %v593 = vmax.f32 %v577, 0.0
      %v594 = vmax.f32 %v578, 0.0
      %v595 = vmax.f32 %v579, 0.0
      %v596 = vmax.f32 %v580, 0.0
      %v597 = vmax.f32 %v581, 0.0
      %v598 = vmax.f32 %v582, 0.0
      %v599 = vmax.f32 %v583, 0.0
      %v600 = vmax.f32 %v584, 0.0
      %v601 = vmax.f32 %v585, 0.0
      %v602 = vmax.f32 %v586, 0.0
      %v603 = vmax.f32 %v587, 0.0
      %v604 = vmax.f32 %v588, 0.0
      %v605 = vmax.f32 %v589, 0.0
      %v606 = vpack.c.bf16 %v598, %v590
      %v607 = vpack.c.bf16 %v599, %v591
      %v608 = vpack.c.bf16 %v600, %v592
      %v609 = vpack.c.bf16 %v601, %v593
      %v610 = vpack.c.bf16 %v602, %v594
      %v611 = vpack.c.bf16 %v603, %v595
      %v612 = vpack.c.bf16 %v604, %v596
      %v613 = vpack.c.bf16 %v605, %v597
      %v614 = vld [vmem:[#allocation8] sm:$0xf]
      %v615 = vld [vmem:[#allocation8 + $0x4] sm:$0xf]
      %v616 = vld [vmem:[#allocation8 + $0x8] sm:$0xf]
      %v617 = vld [vmem:[#allocation8 + $0xc] sm:$0xf]
      %v618 = vld [vmem:[#allocation8 + $0x10] sm:$0xf]
      %v619 = vld [vmem:[#allocation8 + $0x14] sm:$0xf]
      %v620 = vld [vmem:[#allocation8 + $0x18] sm:$0xf]
      %v621 = vld [vmem:[#allocation8 + $0x1c] sm:$0xf]
      %v622 = vld [vmem:[#allocation8 + $0x20] sm:$0xf]
      %v623 = vld [vmem:[#allocation8 + $0x24] sm:$0xf]
      %v624 = vld [vmem:[#allocation8 + $0x28] sm:$0xf]
      %v625 = vld [vmem:[#allocation8 + $0x2c] sm:$0xf]
      %v626 = vld [vmem:[#allocation8 + $0x30] sm:$0xf]
      %v627 = vld [vmem:[#allocation8 + $0x34] sm:$0xf]
      %v628 = vld [vmem:[#allocation8 + $0x38] sm:$0xf]
      %v629 = vld [vmem:[#allocation8 + $0x3c] sm:$0xf]
      %v630 = vld [vmem:[#allocation8 + $0x40] sm:$0xf]
      %v631 = vld [vmem:[#allocation8 + $0x44] sm:$0xf]
      %v632 = vld [vmem:[#allocation8 + $0x48] sm:$0xf]
      %v633 = vld [vmem:[#allocation8 + $0x4c] sm:$0xf]
      %v634 = vld [vmem:[#allocation8 + $0x50] sm:$0xf]
      %v635 = vld [vmem:[#allocation8 + $0x54] sm:$0xf]
      %v636 = vld [vmem:[#allocation8 + $0x58] sm:$0xf]
      %v637 = vld [vmem:[#allocation8 + $0x5c] sm:$0xf]
      %v638 = vld [vmem:[#allocation8 + $0x60] sm:$0xf]
      %v639 = vld [vmem:[#allocation8 + $0x64] sm:$0xf]
      %v640 = vld [vmem:[#allocation8 + $0x68] sm:$0xf]
      %v641 = vld [vmem:[#allocation8 + $0x6c] sm:$0xf]
      %v642 = vld [vmem:[#allocation8 + $0x70] sm:$0xf]
      %v643 = vld [vmem:[#allocation8 + $0x74] sm:$0xf]
      %v644 = vld [vmem:[#allocation8 + $0x78] sm:$0xf]
      %v645 = vld [vmem:[#allocation8 + $0x7c] sm:$0xf]
      %v646 = vld [vmem:[#allocation8 + $0x80] sm:$0xf]
      %v647 = vld [vmem:[#allocation8 + $0x84] sm:$0xf]
      %v648 = vld [vmem:[#allocation8 + $0x88] sm:$0xf]
      %v649 = vld [vmem:[#allocation8 + $0x8c] sm:$0xf]
      %v650 = vld [vmem:[#allocation8 + $0x90] sm:$0xf]
      %v651 = vld [vmem:[#allocation8 + $0x94] sm:$0xf]
      %v652 = vld [vmem:[#allocation8 + $0x98] sm:$0xf]
      %v653 = vld [vmem:[#allocation8 + $0x9c] sm:$0xf]
      %v654 = vld [vmem:[#allocation8 + $0xa0] sm:$0xf]
      %v655 = vld [vmem:[#allocation8 + $0xa4] sm:$0xf]
      %v656 = vld [vmem:[#allocation8 + $0xa8] sm:$0xf]
      %v657 = vld [vmem:[#allocation8 + $0xac] sm:$0xf]
      %v658 = vld [vmem:[#allocation8 + $0xb0] sm:$0xf]
      %v659 = vld [vmem:[#allocation8 + $0xb4] sm:$0xf]
      %v660 = vld [vmem:[#allocation8 + $0xb8] sm:$0xf]
      %v661 = vld [vmem:[#allocation8 + $0xbc] sm:$0xf]
      %v662 = vld [vmem:[#allocation8 + $0xc0] sm:$0xf]
      %v663 = vld [vmem:[#allocation8 + $0xc4] sm:$0xf]
      %v664 = vld [vmem:[#allocation8 + $0xc8] sm:$0xf]
      %v665 = vld [vmem:[#allocation8 + $0xcc] sm:$0xf]
      %v666 = vld [vmem:[#allocation8 + $0xd0] sm:$0xf]
      %v667 = vld [vmem:[#allocation8 + $0xd4] sm:$0xf]
      %v668 = vld [vmem:[#allocation8 + $0xd8] sm:$0xf]
      %v669 = vld [vmem:[#allocation8 + $0xdc] sm:$0xf]
      %v670 = vld [vmem:[#allocation8 + $0xe0] sm:$0xf]
      %v671 = vld [vmem:[#allocation8 + $0xe4] sm:$0xf]
      %v672 = vld [vmem:[#allocation8 + $0xe8] sm:$0xf]
      %v673 = vld [vmem:[#allocation8 + $0xec] sm:$0xf]
      %v674 = vld [vmem:[#allocation8 + $0xf0] sm:$0xf]
      %v675 = vld [vmem:[#allocation8 + $0xf4] sm:$0xf]
      %v676 = vld [vmem:[#allocation8 + $0xf8] sm:$0xf]
      %v677 = vld [vmem:[#allocation8 + $0xfc] sm:$0xf]
      %v678 = vld [vmem:[#allocation8 + $0x100] sm:$0xf]
      %v679 = vld [vmem:[#allocation8 + $0x104] sm:$0xf]
      %v680 = vld [vmem:[#allocation8 + $0x108] sm:$0xf]
      %v681 = vld [vmem:[#allocation8 + $0x10c] sm:$0xf]
      %v682 = vld [vmem:[#allocation8 + $0x110] sm:$0xf]
      %v683 = vld [vmem:[#allocation8 + $0x114] sm:$0xf]
      %v684 = vld [vmem:[#allocation8 + $0x118] sm:$0xf]
      %v685 = vld [vmem:[#allocation8 + $0x11c] sm:$0xf]
      %v686 = vld [vmem:[#allocation8 + $0x120] sm:$0xf]
      %v687 = vld [vmem:[#allocation8 + $0x124] sm:$0xf]
      %v688 = vld [vmem:[#allocation8 + $0x128] sm:$0xf]
      %v689 = vld [vmem:[#allocation8 + $0x12c] sm:$0xf]
      %v690 = vld [vmem:[#allocation8 + $0x130] sm:$0xf]
      %v691 = vld [vmem:[#allocation8 + $0x134] sm:$0xf]
      %v692 = vld [vmem:[#allocation8 + $0x138] sm:$0xf]
      %v693 = vld [vmem:[#allocation8 + $0x13c] sm:$0xf]
      %v694 = vld [vmem:[#allocation8 + $0x140] sm:$0xf]
      %v695 = vld [vmem:[#allocation8 + $0x144] sm:$0xf]
      %v696 = vld [vmem:[#allocation8 + $0x148] sm:$0xf]
      %v697 = vld [vmem:[#allocation8 + $0x14c] sm:$0xf]
      %v698 = vld [vmem:[#allocation8 + $0x150] sm:$0xf]
      %v699 = vld [vmem:[#allocation8 + $0x154] sm:$0xf]
      %v700 = vld [vmem:[#allocation8 + $0x158] sm:$0xf]
      %v701 = vld [vmem:[#allocation8 + $0x15c] sm:$0xf]
      %v702 = vld [vmem:[#allocation8 + $0x160] sm:$0xf]
      %v703 = vld [vmem:[#allocation8 + $0x164] sm:$0xf]
      %v704 = vld [vmem:[#allocation8 + $0x168] sm:$0xf]
      %v705 = vld [vmem:[#allocation8 + $0x16c] sm:$0xf]
      %v706 = vld [vmem:[#allocation8 + $0x170] sm:$0xf]
      %v707 = vld [vmem:[#allocation8 + $0x174] sm:$0xf]
      %v708 = vld [vmem:[#allocation8 + $0x178] sm:$0xf]
      %v709 = vld [vmem:[#allocation8 + $0x17c] sm:$0xf]
      %v710 = vld [vmem:[#allocation8 + $0x180] sm:$0xf]
      %v711 = vld [vmem:[#allocation8 + $0x184] sm:$0xf]
      %v712 = vld [vmem:[#allocation8 + $0x188] sm:$0xf]
      %v713 = vld [vmem:[#allocation8 + $0x18c] sm:$0xf]
      %v714 = vld [vmem:[#allocation8 + $0x190] sm:$0xf]
      %v715 = vld [vmem:[#allocation8 + $0x194] sm:$0xf]
      %v716 = vld [vmem:[#allocation8 + $0x198] sm:$0xf]
      %v717 = vld [vmem:[#allocation8 + $0x19c] sm:$0xf]
      %v718 = vld [vmem:[#allocation8 + $0x1a0] sm:$0xf]
      %v719 = vld [vmem:[#allocation8 + $0x1a4] sm:$0xf]
      %v720 = vld [vmem:[#allocation8 + $0x1a8] sm:$0xf]
      %v721 = vld [vmem:[#allocation8 + $0x1ac] sm:$0xf]
      %v722 = vld [vmem:[#allocation8 + $0x1b0] sm:$0xf]
      %v723 = vld [vmem:[#allocation8 + $0x1b4] sm:$0xf]
      %v724 = vld [vmem:[#allocation8 + $0x1b8] sm:$0xf]
      %v725 = vld [vmem:[#allocation8 + $0x1bc] sm:$0xf]
      %v726 = vld [vmem:[#allocation8 + $0x1c0] sm:$0xf]
      %v727 = vld [vmem:[#allocation8 + $0x1c4] sm:$0xf]
      %v728 = vld [vmem:[#allocation8 + $0x1c8] sm:$0xf]
      %v729 = vld [vmem:[#allocation8 + $0x1cc] sm:$0xf]
      %v730 = vld [vmem:[#allocation8 + $0x1d0] sm:$0xf]
      %v731 = vld [vmem:[#allocation8 + $0x1d4] sm:$0xf]
      %v732 = vld [vmem:[#allocation8 + $0x1d8] sm:$0xf]
      %v733 = vld [vmem:[#allocation8 + $0x1dc] sm:$0xf]
      %v734 = vld [vmem:[#allocation8 + $0x1e0] sm:$0xf]
      %v735 = vld [vmem:[#allocation8 + $0x1e4] sm:$0xf]
      %v736 = vld [vmem:[#allocation8 + $0x1e8] sm:$0xf]
      %v737 = vld [vmem:[#allocation8 + $0x1ec] sm:$0xf]
      %v738 = vld [vmem:[#allocation8 + $0x1f0] sm:$0xf]
      %v739 = vld [vmem:[#allocation8 + $0x1f4] sm:$0xf]
      %v740 = vld [vmem:[#allocation8 + $0x1f8] sm:$0xf]
      %v741 = vld [vmem:[#allocation8 + $0x1fc] sm:$0xf]
      %v742 = vld [vmem:[%s4] sm:$0x1]
      %v744 = vlaneseq
      %v745 = vshrl.u32 %v744, 7
      %v746 = vsub.s32 0, %v745
      %v747 = vrot.slane %v742, %v746
      %v877 = vunpack.c.l.b16 %v614
      %v878 = vunpack.c.l.b16 %v615
      %v879 = vunpack.c.l.b16 %v616
      %v880 = vunpack.c.l.b16 %v617
      %v881 = vunpack.c.l.b16 %v618
      %v882 = vunpack.c.l.b16 %v619
      %v883 = vunpack.c.l.b16 %v620
      %v884 = vunpack.c.l.b16 %v621
      %v885 = vunpack.c.l.b16 %v622
      %v886 = vunpack.c.l.b16 %v623
      %v887 = vunpack.c.l.b16 %v624
      %v888 = vunpack.c.l.b16 %v625
      %v889 = vunpack.c.l.b16 %v626
      %v890 = vunpack.c.l.b16 %v627
      %v891 = vunpack.c.l.b16 %v628
      %v892 = vunpack.c.l.b16 %v629
      %v893 = vunpack.c.l.b16 %v630
      %v894 = vunpack.c.l.b16 %v631
      %v895 = vunpack.c.l.b16 %v632
      %v896 = vunpack.c.l.b16 %v633
      %v897 = vunpack.c.l.b16 %v634
      %v898 = vunpack.c.l.b16 %v635
      %v899 = vunpack.c.l.b16 %v636
      %v900 = vunpack.c.l.b16 %v637
      %v901 = vunpack.c.l.b16 %v638
      %v902 = vunpack.c.l.b16 %v639
      %v903 = vunpack.c.l.b16 %v640
      %v904 = vunpack.c.l.b16 %v641
      %v905 = vunpack.c.l.b16 %v642
      %v906 = vunpack.c.l.b16 %v643
      %v907 = vunpack.c.l.b16 %v644
      %v908 = vunpack.c.l.b16 %v645
      %v909 = vunpack.c.l.b16 %v646
      %v910 = vunpack.c.l.b16 %v647
      %v911 = vunpack.c.l.b16 %v648
      %v912 = vunpack.c.l.b16 %v649
      %v913 = vunpack.c.l.b16 %v650
      %v914 = vunpack.c.l.b16 %v651
      %v915 = vunpack.c.l.b16 %v652
      %v916 = vunpack.c.l.b16 %v653
      %v917 = vunpack.c.l.b16 %v654
      %v918 = vunpack.c.l.b16 %v655
      %v919 = vunpack.c.l.b16 %v656
      %v920 = vunpack.c.l.b16 %v657
      %v921 = vunpack.c.l.b16 %v658
      %v922 = vunpack.c.l.b16 %v659
      %v923 = vunpack.c.l.b16 %v660
      %v924 = vunpack.c.l.b16 %v661
      %v925 = vunpack.c.l.b16 %v662
      %v926 = vunpack.c.l.b16 %v663
      %v927 = vunpack.c.l.b16 %v664
      %v928 = vunpack.c.l.b16 %v665
      %v929 = vunpack.c.l.b16 %v666
      %v930 = vunpack.c.l.b16 %v667
      %v931 = vunpack.c.l.b16 %v668
      %v932 = vunpack.c.l.b16 %v669
      %v933 = vunpack.c.l.b16 %v670
      %v934 = vunpack.c.l.b16 %v671
      %v935 = vunpack.c.l.b16 %v672
      %v936 = vunpack.c.l.b16 %v673
      %v937 = vunpack.c.l.b16 %v674
      %v938 = vunpack.c.l.b16 %v675
      %v939 = vunpack.c.l.b16 %v676
      %v940 = vunpack.c.l.b16 %v677
      %v941 = vunpack.c.l.b16 %v678
      %v942 = vunpack.c.l.b16 %v679
      %v943 = vunpack.c.l.b16 %v680
      %v944 = vunpack.c.l.b16 %v681
      %v945 = vunpack.c.l.b16 %v682
      %v946 = vunpack.c.l.b16 %v683
      %v947 = vunpack.c.l.b16 %v684
      %v948 = vunpack.c.l.b16 %v685
      %v949 = vunpack.c.l.b16 %v686
      %v950 = vunpack.c.l.b16 %v687
      %v951 = vunpack.c.l.b16 %v688
      %v952 = vunpack.c.l.b16 %v689
      %v953 = vunpack.c.l.b16 %v690
      %v954 = vunpack.c.l.b16 %v691
      %v955 = vunpack.c.l.b16 %v692
      %v956 = vunpack.c.l.b16 %v693
      %v957 = vunpack.c.l.b16 %v694
      %v958 = vunpack.c.l.b16 %v695
      %v959 = vunpack.c.l.b16 %v696
      %v960 = vunpack.c.l.b16 %v697
      %v961 = vunpack.c.l.b16 %v698
      %v962 = vunpack.c.l.b16 %v699
      %v963 = vunpack.c.l.b16 %v700
      %v964 = vunpack.c.l.b16 %v701
      %v965 = vunpack.c.l.b16 %v702
      %v966 = vunpack.c.l.b16 %v703
      %v967 = vunpack.c.l.b16 %v704
      %v968 = vunpack.c.l.b16 %v705
      %v969 = vunpack.c.l.b16 %v706
      %v970 = vunpack.c.l.b16 %v707
      %v971 = vunpack.c.l.b16 %v708
      %v972 = vunpack.c.l.b16 %v709
      %v973 = vunpack.c.l.b16 %v710
      %v974 = vunpack.c.l.b16 %v711
      %v975 = vunpack.c.l.b16 %v712
      %v976 = vunpack.c.l.b16 %v713
      %v977 = vunpack.c.l.b16 %v714
      %v978 = vunpack.c.l.b16 %v715
      %v979 = vunpack.c.l.b16 %v716
      %v980 = vunpack.c.l.b16 %v717
      %v981 = vunpack.c.l.b16 %v718
      %v982 = vunpack.c.l.b16 %v719
      %v983 = vunpack.c.l.b16 %v720
      %v984 = vunpack.c.l.b16 %v721
      %v985 = vunpack.c.l.b16 %v722
      %v986 = vunpack.c.l.b16 %v723
      %v987 = vunpack.c.l.b16 %v724
      %v988 = vunpack.c.l.b16 %v725
      %v989 = vunpack.c.l.b16 %v726
      %v990 = vunpack.c.l.b16 %v727
      %v991 = vunpack.c.l.b16 %v728
      %v992 = vunpack.c.l.b16 %v729
      %v993 = vunpack.c.l.b16 %v730
      %v994 = vunpack.c.l.b16 %v731
      %v995 = vunpack.c.l.b16 %v732
      %v996 = vunpack.c.l.b16 %v733
      %v997 = vunpack.c.l.b16 %v734
      %v998 = vunpack.c.l.b16 %v735
      %v999 = vunpack.c.l.b16 %v736
      %v1000 = vunpack.c.l.b16 %v737
      %v1001 = vunpack.c.l.b16 %v738
      %v1002 = vunpack.c.l.b16 %v739
      %v1003 = vunpack.c.l.b16 %v740
      %v1004 = vunpack.c.l.b16 %v741
      %v1005 = vpack.c.b16 %v878, %v877
      %v1006 = vpack.c.b16 %v880, %v879
      %v1007 = vpack.c.b16 %v882, %v881
      %v1008 = vpack.c.b16 %v884, %v883
      %v1009 = vpack.c.b16 %v886, %v885
      %v1010 = vpack.c.b16 %v888, %v887
      %v1011 = vpack.c.b16 %v890, %v889
      %v1012 = vpack.c.b16 %v892, %v891
      %v1013 = vpack.c.b16 %v894, %v893
      %v1014 = vpack.c.b16 %v896, %v895
      %v1015 = vpack.c.b16 %v898, %v897
      %v1016 = vpack.c.b16 %v900, %v899
      %v1017 = vpack.c.b16 %v902, %v901
      %v1018 = vpack.c.b16 %v904, %v903
      %v1019 = vpack.c.b16 %v906, %v905
      %v1020 = vpack.c.b16 %v908, %v907
      %v1021 = vpack.c.b16 %v910, %v909
      %v1022 = vpack.c.b16 %v912, %v911
      %v1023 = vpack.c.b16 %v914, %v913
      %v1024 = vpack.c.b16 %v916, %v915
      %v1025 = vpack.c.b16 %v918, %v917
      %v1026 = vpack.c.b16 %v920, %v919
      %v1027 = vpack.c.b16 %v922, %v921
      %v1028 = vpack.c.b16 %v924, %v923
      %v1029 = vpack.c.b16 %v926, %v925
      %v1030 = vpack.c.b16 %v928, %v927
      %v1031 = vpack.c.b16 %v930, %v929
      %v1032 = vpack.c.b16 %v932, %v931
      %v1033 = vpack.c.b16 %v934, %v933
      %v1034 = vpack.c.b16 %v936, %v935
      %v1035 = vpack.c.b16 %v938, %v937
      %v1036 = vpack.c.b16 %v940, %v939
      %v1037 = vpack.c.b16 %v942, %v941
      %v1038 = vpack.c.b16 %v944, %v943
      %v1039 = vpack.c.b16 %v946, %v945
      %v1040 = vpack.c.b16 %v948, %v947
      %v1041 = vpack.c.b16 %v950, %v949
      %v1042 = vpack.c.b16 %v952, %v951
      %v1043 = vpack.c.b16 %v954, %v953
      %v1044 = vpack.c.b16 %v956, %v955
      %v1045 = vpack.c.b16 %v958, %v957
      %v1046 = vpack.c.b16 %v960, %v959
      %v1047 = vpack.c.b16 %v962, %v961
      %v1048 = vpack.c.b16 %v964, %v963
      %v1049 = vpack.c.b16 %v966, %v965
      %v1050 = vpack.c.b16 %v968, %v967
      %v1051 = vpack.c.b16 %v970, %v969
      %v1052 = vpack.c.b16 %v972, %v971
      %v1053 = vpack.c.b16 %v974, %v973
      %v1054 = vpack.c.b16 %v976, %v975
      %v1055 = vpack.c.b16 %v978, %v977
      %v1056 = vpack.c.b16 %v980, %v979
      %v1057 = vpack.c.b16 %v982, %v981
      %v1058 = vpack.c.b16 %v984, %v983
      %v1059 = vpack.c.b16 %v986, %v985
      %v1060 = vpack.c.b16 %v988, %v987
      %v1061 = vpack.c.b16 %v990, %v989
      %v1062 = vpack.c.b16 %v992, %v991
      %v1063 = vpack.c.b16 %v994, %v993
      %v1064 = vpack.c.b16 %v996, %v995
      %v1065 = vpack.c.b16 %v998, %v997
      %v1066 = vpack.c.b16 %v1000, %v999
      %v1067 = vpack.c.b16 %v1002, %v1001
      %v1068 = vpack.c.b16 %v1004, %v1003
      %1133 = vmatprep.subr.bf16.mxu0 0
      %1134 = vmatpush1.bf16.msra.mxu0 %v1012
      %1135 = vmatprep.subr.bf16.mxu0 0
      %1136 = vmatpush1.bf16.msra.mxu0 %v1011
      %1137 = vmatprep.subr.bf16.mxu0 0
      %1138 = vmatpush1.bf16.msra.mxu0 %v1010
      %1139 = vmatprep.subr.bf16.mxu0 0
      %1140 = vmatpush1.bf16.msra.mxu0 %v1009
      %1141 = vmatprep.subr.bf16.mxu0 0
      %1142 = vmatpush1.bf16.msra.mxu0 %v1008
      %1143 = vmatprep.subr.bf16.mxu0 0
      %1144 = vmatpush1.bf16.msra.mxu0 %v1007
      %1145 = vmatprep.subr.bf16.mxu0 0
      %1146 = vmatpush1.bf16.msra.mxu0 %v1006
      %1147 = vmatprep.subr.bf16.mxu0 0
      %1148 = vmatpush1.bf16.msra.mxu0 %v1005
      %1149 = vmatprep.subr.bf16.mxu0 0
      %1150 = vmatpush2.bf16.msra.mxu0 %v1020
      %1151 = vmatprep.subr.bf16.mxu0 0
      %1152 = vmatpush2.bf16.msra.mxu0 %v1019
      %1153 = vmatprep.subr.bf16.mxu0 0
      %1154 = vmatpush2.bf16.msra.mxu0 %v1018
      %1155 = vmatprep.subr.bf16.mxu0 0
      %1156 = vmatpush2.bf16.msra.mxu0 %v1017
      %1157 = vmatprep.subr.bf16.mxu0 0
      %1158 = vmatpush2.bf16.msra.mxu0 %v1016
      %1159 = vmatprep.subr.bf16.mxu0 0
      %1160 = vmatpush2.bf16.msra.mxu0 %v1015
      %1161 = vmatprep.subr.bf16.mxu0 0
      %1162 = vmatpush2.bf16.msra.mxu0 %v1014
      %1163 = vmatprep.subr.bf16.mxu0 0
      %1164 = vmatpush2.bf16.msra.mxu0 %v1013
      %1165 = vmatprep.mubr.bf16.mxu0 %v607
      %1166 = vmatmul.mubr.bf16.gmra.mxu0 %v606
      %v1167 = vpop.f32.mrf.mxu0
      %v1168 = vadd.f32 %v747, %v1167
      %v1169 = vpop.f32.mrf.mxu0
      %v1170 = vpop.f32.mrf.mxu0
      %v1171 = vadd.f32 %v747, %v1170
      %v1172 = vpop.f32.mrf.mxu0
      %1173 = vdwg.mxu0
      %1174 = vmatprep.subr.bf16.mxu0 0
      %1175 = vmatpush1.bf16.msra.mxu0 %v1028
      %1176 = vmatprep.subr.bf16.mxu0 0
      %1177 = vmatpush1.bf16.msra.mxu0 %v1027
      %1178 = vmatprep.subr.bf16.mxu0 0
      %1179 = vmatpush1.bf16.msra.mxu0 %v1026
      %1180 = vmatprep.subr.bf16.mxu0 0
      %1181 = vmatpush1.bf16.msra.mxu0 %v1025
      %1182 = vmatprep.subr.bf16.mxu0 0
      %1183 = vmatpush1.bf16.msra.mxu0 %v1024
      %1184 = vmatprep.subr.bf16.mxu0 0
      %1185 = vmatpush1.bf16.msra.mxu0 %v1023
      %1186 = vmatprep.subr.bf16.mxu0 0
      %1187 = vmatpush1.bf16.msra.mxu0 %v1022
      %1188 = vmatprep.subr.bf16.mxu0 0
      %1189 = vmatpush1.bf16.msra.mxu0 %v1021
      %1190 = vmatprep.subr.bf16.mxu0 0
      %1191 = vmatpush2.bf16.msra.mxu0 %v1036
      %1192 = vmatprep.subr.bf16.mxu0 0
      %1193 = vmatpush2.bf16.msra.mxu0 %v1035
      %1194 = vmatprep.subr.bf16.mxu0 0
      %1195 = vmatpush2.bf16.msra.mxu0 %v1034
      %1196 = vmatprep.subr.bf16.mxu0 0
      %1197 = vmatpush2.bf16.msra.mxu0 %v1033
      %1198 = vmatprep.subr.bf16.mxu0 0
      %1199 = vmatpush2.bf16.msra.mxu0 %v1032
      %1200 = vmatprep.subr.bf16.mxu0 0
      %1201 = vmatpush2.bf16.msra.mxu0 %v1031
      %1202 = vmatprep.subr.bf16.mxu0 0
      %1203 = vmatpush2.bf16.msra.mxu0 %v1030
      %1204 = vmatprep.subr.bf16.mxu0 0
      %1205 = vmatpush2.bf16.msra.mxu0 %v1029
      %1206 = vmatprep.mubr.bf16.mxu0 %v609
      %1207 = vmatmul.mubr.bf16.gmra.mxu0 %v608
      %v1208 = vpop.f32.mrf.mxu0
      %v1209 = vadd.f32 %v1168, %v1208
      %v1210 = vpop.f32.mrf.mxu0
      %v1211 = vpop.f32.mrf.mxu0
      %v1212 = vadd.f32 %v1171, %v1211
      %v1213 = vpop.f32.mrf.mxu0
      %1214 = vdwg.mxu0
      %1215 = vmatprep.subr.bf16.mxu0 0
      %1216 = vmatpush1.bf16.msra.mxu0 %v1044
      %1217 = vmatprep.subr.bf16.mxu0 0
      %1218 = vmatpush1.bf16.msra.mxu0 %v1043
      %1219 = vmatprep.subr.bf16.mxu0 0
      %1220 = vmatpush1.bf16.msra.mxu0 %v1042
      %1221 = vmatprep.subr.bf16.mxu0 0
      %1222 = vmatpush1.bf16.msra.mxu0 %v1041
      %1223 = vmatprep.subr.bf16.mxu0 0
      %1224 = vmatpush1.bf16.msra.mxu0 %v1040
      %1225 = vmatprep.subr.bf16.mxu0 0
      %1226 = vmatpush1.bf16.msra.mxu0 %v1039
      %1227 = vmatprep.subr.bf16.mxu0 0
      %1228 = vmatpush1.bf16.msra.mxu0 %v1038
      %1229 = vmatprep.subr.bf16.mxu0 0
      %1230 = vmatpush1.bf16.msra.mxu0 %v1037
      %1231 = vmatprep.subr.bf16.mxu0 0
      %1232 = vmatpush2.bf16.msra.mxu0 %v1052
      %1233 = vmatprep.subr.bf16.mxu0 0
      %1234 = vmatpush2.bf16.msra.mxu0 %v1051
      %1235 = vmatprep.subr.bf16.mxu0 0
      %1236 = vmatpush2.bf16.msra.mxu0 %v1050
      %1237 = vmatprep.subr.bf16.mxu0 0
      %1238 = vmatpush2.bf16.msra.mxu0 %v1049
      %1239 = vmatprep.subr.bf16.mxu0 0
      %1240 = vmatpush2.bf16.msra.mxu0 %v1048
      %1241 = vmatprep.subr.bf16.mxu0 0
      %1242 = vmatpush2.bf16.msra.mxu0 %v1047
      %1243 = vmatprep.subr.bf16.mxu0 0
      %1244 = vmatpush2.bf16.msra.mxu0 %v1046
      %1245 = vmatprep.subr.bf16.mxu0 0
      %1246 = vmatpush2.bf16.msra.mxu0 %v1045
      %1247 = vmatprep.mubr.bf16.mxu0 %v611
      %1248 = vmatmul.mubr.bf16.gmra.mxu0 %v610
      %v1249 = vpop.f32.mrf.mxu0
      %v1250 = vadd.f32 %v1209, %v1249
      %v1251 = vpop.f32.mrf.mxu0
      %v1252 = vpop.f32.mrf.mxu0
      %v1253 = vadd.f32 %v1212, %v1252
      %v1254 = vpop.f32.mrf.mxu0
      %1255 = vdwg.mxu0
      %1256 = vmatprep.subr.bf16.mxu0 0
      %1257 = vmatpush1.bf16.msra.mxu0 %v1060
      %1258 = vmatprep.subr.bf16.mxu0 0
      %1259 = vmatpush1.bf16.msra.mxu0 %v1059
      %1260 = vmatprep.subr.bf16.mxu0 0
      %1261 = vmatpush1.bf16.msra.mxu0 %v1058
      %1262 = vmatprep.subr.bf16.mxu0 0
      %1263 = vmatpush1.bf16.msra.mxu0 %v1057
      %1264 = vmatprep.subr.bf16.mxu0 0
      %1265 = vmatpush1.bf16.msra.mxu0 %v1056
      %1266 = vmatprep.subr.bf16.mxu0 0
      %1267 = vmatpush1.bf16.msra.mxu0 %v1055
      %1268 = vmatprep.subr.bf16.mxu0 0
      %1269 = vmatpush1.bf16.msra.mxu0 %v1054
      %1270 = vmatprep.subr.bf16.mxu0 0
      %1271 = vmatpush1.bf16.msra.mxu0 %v1053
      %1272 = vmatprep.subr.bf16.mxu0 0
      %1273 = vmatpush2.bf16.msra.mxu0 %v1068
      %1274 = vmatprep.subr.bf16.mxu0 0
      %1275 = vmatpush2.bf16.msra.mxu0 %v1067
      %1276 = vmatprep.subr.bf16.mxu0 0
      %1277 = vmatpush2.bf16.msra.mxu0 %v1066
      %1278 = vmatprep.subr.bf16.mxu0 0
      %1279 = vmatpush2.bf16.msra.mxu0 %v1065
      %1280 = vmatprep.subr.bf16.mxu0 0
      %1281 = vmatpush2.bf16.msra.mxu0 %v1064
      %1282 = vmatprep.subr.bf16.mxu0 0
      %1283 = vmatpush2.bf16.msra.mxu0 %v1063
      %1284 = vmatprep.subr.bf16.mxu0 0
      %1285 = vmatpush2.bf16.msra.mxu0 %v1062
      %1286 = vmatprep.subr.bf16.mxu0 0
      %1287 = vmatpush2.bf16.msra.mxu0 %v1061
      %1288 = vmatprep.mubr.bf16.mxu0 %v613
      %1289 = vmatmul.mubr.bf16.gmra.mxu0 %v612
      %v1290 = vpop.f32.mrf.mxu0
      %v1291 = vadd.f32 %v1250, %v1290
      %v1292 = vpop.f32.mrf.mxu0
      %v1293 = vpop.f32.mrf.mxu0
      %v1294 = vadd.f32 %v1253, %v1293
      %v1295 = vpop.f32.mrf.mxu0
      %1296 = vdwg.mxu0
      %1297 = vst [vmem:[%s5] sm:$0xff] %v1291
      %1298 = vst [vmem:[%s5 + $0x8] sm:$0xff] %v1294
    $region45: #{view_classifier_forward.1} parent=1 // pred_fallthru
      _
    // Predicated region
    $region46: #{view_classifier_forward.1} parent=1 // pred_check
      _
    $region47: #{view_classifier_forward.1} parent=1 // pred_check_branch
      %1300 = sbr.rel (0) target = $region49
    $region48: #{view_classifier_forward.1} parent=1 // pred_region
      _
    $region49: #{view_classifier_forward.1} parent=1 // pred_fallthru
      _
    // Predicated region
    $region50: #{view_classifier_forward.1} parent=1 // pred_check
      _
    $region51: #{view_classifier_forward.1} parent=1 // pred_check_branch
      %1302 = sbr.rel (0) target = $region53
    $region52: #{view_classifier_forward.1} parent=1 // pred_region
      _
    $region53: #{view_classifier_forward.1} parent=1 // pred_fallthru
      _
    %1303 = vsyncpa [#allocation4], 1
    %1304 = vsyncpa [#allocation6], 1
    %1305 = vsyncpa [#allocation9], 1

</llo_original>
